<compile_context>
chip_gen: v7x
topology: tpu7x:2x2x1
jax: 0.10.0
libtpu: 0.0.40
codegen_flags: <defaults>
</compile_context>

<pallas_src>
import functools

import jax
import jax.numpy as jnp
from jax.experimental import pallas as pl
from jax.experimental.pallas import tpu as pltpu


# ----------------------------- Pallas kernel ------------------------------- #

def _convlayer_kernel(x_ref, w_ref, gamma_ref, beta_ref, alpha_ref,
                      out_ref, xpad_sc, slab_sc,
                      *, n_imgs, cin, cin_pad, cout, w, hw, pad_off,
                      inv_m, eps, use_bf16_mxu):
    """Fused conv3x3 + batch-stat BatchNorm + PReLU, single grid step."""
    # Zero both scratches once.  Only the data regions are overwritten below,
    # so the halo lanes of xpad_sc and the channel-pad rows of slab_sc stay
    # zero for every image.
    xpad_sc[...] = jnp.zeros_like(xpad_sc)
    slab_sc[...] = jnp.zeros_like(slab_sc)

    # Column masks for the left/right kernel columns (they would otherwise
    # read the neighbouring image row).  Applied to the small (Cin,HW) slabs
    # before the matmul (cheaper than masking (Cout,HW) accumulators).
    col = jax.lax.broadcasted_iota(jnp.int32, (1, hw), 1) % w
    left_ok = col >= 1          # kw = 0 needs c-1 >= 0
    right_ok = col <= w - 2     # kw = 2 needs c+1 <= W-1

    wmat = w_ref[...]                                   # (Cout, 9*Cin_pad)
    if use_bf16_mxu:
        wmat = wmat.astype(jnp.bfloat16)

    def conv_image(img):
        # Place the flattened image at a lane-aligned offset inside the zero
        # halo; top/bottom row padding then falls out of the halo for free.
        xpad_sc[:, pad_off:pad_off + hw] = x_ref[img]
        xpad = xpad_sc[...]                             # (Cin, Lpad) value
        for kh in range(3):
            for kw in range(3):
                start = pad_off + (kh - 1) * w + (kw - 1)
                chunk = xpad[:, start:start + hw]       # (Cin, HW) static slice
                if kw == 0:
                    chunk = jnp.where(left_ok, chunk, 0.0)
                elif kw == 2:
                    chunk = jnp.where(right_ok, chunk, 0.0)
                row0 = (kh * 3 + kw) * cin_pad          # sublane-aligned offset
                slab_sc[row0:row0 + cin, :] = chunk
        slab = slab_sc[...]                             # (9*Cin_pad, HW)
        if use_bf16_mxu:
            slab = slab.astype(jnp.bfloat16)
        # Single MXU pass per image: K = 9*Cin_pad instead of 9 tiny K=Cin dots.
        return jnp.dot(wmat, slab, preferred_element_type=jnp.float32)

    # ---- pass A: conv each image -> out_ref (VMEM), accumulate channel sums -
    ssum = jnp.zeros((cout, 1), jnp.float32)
    for img in range(n_imgs):
        y = conv_image(img)
        out_ref[img] = y                                # cache pre-BN conv out
        ssum = ssum + jnp.sum(y, axis=1, keepdims=True)
    mean = ssum * inv_m
    # Conv bias intentionally omitted: it cancels under training-mode BN
    # (mean subtraction removes it; variance is unchanged).

    # ---- pass B: centered sum of squares (two-pass, VMEM-resident y) --------
    ssq = jnp.zeros((cout, 1), jnp.float32)
    for img in range(n_imgs):
        d = out_ref[img] - mean
        ssq = ssq + jnp.sum(d * d, axis=1, keepdims=True)
    var = ssq * inv_m                                   # biased (ddof=0)
    scale = gamma_ref[...] * jax.lax.rsqrt(var + eps)
    shift = beta_ref[...] - mean * scale

    # ---- pass C: normalize + PReLU, in place in the output block ------------
    alpha = alpha_ref[0]
    for img in range(n_imgs):
        z = out_ref[img] * scale + shift
        out_ref[img] = jnp.where(z >= 0.0, z, alpha * z)


# ------------------------------ JAX wrapper --------------------------------- #

def convlayer_forward(x, wgt, b, gamma, beta, alpha, *, eps=1e-5,
                      use_bf16_mxu=False):
    """x: (N, Cin, H, W) f32 -> (N, Cout, H, W) f32 (NCHW). k=3, p=1, s=1, d=1."""
    del b  # conv bias cancels exactly under training-mode BatchNorm
    n, cin, h, wdt = x.shape
    cout = wgt.shape[0]
    hw = h * wdt

    cin_pad = ((cin + 7) // 8) * 8          # sublane-aligned per-tap stride
    pad_off = 128                           # lane-aligned halo offset
    assert wdt + 1 <= pad_off, "kernel assumes image width <= 127"
    lpad = pad_off + ((hw + wdt + 1 + 127) // 128) * 128

    # Free layout change only (merge trailing dims) — no HBM round trip of x.
    xf = x.reshape(n, cin, hw)

    # Fold the 3x3 taps into the contraction dim: (Cout, 9*Cin_pad), tap-major,
    # channel-minor, zero-padded channels match the zero rows of the slab.
    wt = jnp.transpose(wgt, (0, 2, 3, 1))                       # (Cout, kh, kw, Cin)
    wt = jnp.pad(wt, ((0, 0), (0, 0), (0, 0), (0, cin_pad - cin)))
    wfold = wt.reshape(cout, 9 * cin_pad).astype(jnp.float32)

    gamma_c = gamma.reshape(cout, 1).astype(jnp.float32)
    beta_c = beta.reshape(cout, 1).astype(jnp.float32)
    alpha_s = alpha.reshape(1).astype(jnp.float32)

    kern = functools.partial(
        _convlayer_kernel, n_imgs=n, cin=cin, cin_pad=cin_pad, cout=cout,
        w=wdt, hw=hw, pad_off=pad_off, inv_m=1.0 / float(n * hw),
        eps=float(eps), use_bf16_mxu=use_bf16_mxu)

    out = pl.pallas_call(
        kern,
        out_shape=jax.ShapeDtypeStruct((n, cout, hw), jnp.float32),
        grid=(1,),                                   # single step: no per-step
        in_specs=[                                   # overhead, x DMA'd once
            pl.BlockSpec((n, cin, hw), lambda i: (0, 0, 0)),          # x (flat)
            pl.BlockSpec((cout, 9 * cin_pad), lambda i: (0, 0)),      # weights
            pl.BlockSpec((cout, 1), lambda i: (0, 0)),                # gamma
            pl.BlockSpec((cout, 1), lambda i: (0, 0)),                # beta
            pl.BlockSpec(memory_space=pltpu.MemorySpace.SMEM),        # alpha
        ],
        out_specs=pl.BlockSpec((n, cout, hw), lambda i: (0, 0, 0)),
        scratch_shapes=[
            pltpu.VMEM((cin, lpad), jnp.float32),            # zero-halo image
            pltpu.VMEM((9 * cin_pad, hw), jnp.float32),      # stacked im2col slab
        ],
        compiler_params=pltpu.CompilerParams(
            dimension_semantics=("arbitrary",)),
    )(xf, wfold, gamma_c, beta_c, alpha_s)

    # Output is already NCHW-contiguous with the pixel axis flattened.
    return out.reshape(n, cout, h, wdt)


# --------------------------- reference (plain JAX) -------------------------- #

def _reference_forward(x, wgt, b, gamma, beta, alpha, eps=1e-5):
    y = jax.lax.conv_general_dilated(
        x, wgt, window_strides=(1, 1), padding=((1, 1), (1, 1)),
        dimension_numbers=("NCHW", "OIHW", "NCHW"))
    y = y + b.reshape(1, -1, 1, 1)
    mean = y.mean(axis=(0, 2, 3), keepdims=True)
    var = y.var(axis=(0, 2, 3), keepdims=True)      # biased, BN training mode
    z = (y - mean) / jnp.sqrt(var + eps)
    z = z * gamma.reshape(1, -1, 1, 1) + beta.reshape(1, -1, 1, 1)
    return jnp.where(z >= 0, z, alpha * z)


# ---------------------------------- main ------------------------------------ #

if __name__ == "__main__":
    nIn, nOut, k = 4, 8, 3
    N, H, W = 2, 16, 16

    key = jax.random.PRNGKey(0)
    kx, kwt, kb = jax.random.split(key, 3)

    x = jax.random.normal(kx, (N, nIn, H, W), dtype=jnp.float32)
    fan_in = nIn * k * k
    wgt = jax.random.uniform(kwt, (nOut, nIn, k, k), jnp.float32,
                             minval=-1.0 / jnp.sqrt(fan_in),
                             maxval=1.0 / jnp.sqrt(fan_in))
    b = jax.random.uniform(kb, (nOut,), jnp.float32,
                           minval=-1.0 / jnp.sqrt(fan_in),
                           maxval=1.0 / jnp.sqrt(fan_in))
    gamma = jnp.ones((nOut,), jnp.float32)          # BatchNorm2d weight init
    beta = jnp.zeros((nOut,), jnp.float32)          # BatchNorm2d bias init
    alpha = jnp.full((1,), 0.25, jnp.float32)       # PReLU shared alpha

    out = jax.block_until_ready(convlayer_forward(x, wgt, b, gamma, beta, alpha))
    ref = _reference_forward(x, wgt, b, gamma, beta, alpha)

    assert out.shape == (N, nOut, H, W), out.shape
    assert jnp.allclose(out, ref, rtol=1e-3, atol=1e-3), \
        float(jnp.max(jnp.abs(out - ref)))

    print("KERNEL_OK")
</pallas_src>

<mosaic_0001>
module attributes {stable_mosaic.version = 11 : i64} {
  func.func @_convlayer_kernel(%arg0: i32, %arg1: memref<2x4x256xf32, #tpu.memory_space<vmem>>, %arg2: memref<8x72xf32, #tpu.memory_space<vmem>>, %arg3: memref<8x1xf32, #tpu.memory_space<vmem>>, %arg4: memref<8x1xf32, #tpu.memory_space<vmem>>, %arg5: memref<1xf32, #tpu.memory_space<smem>>, %arg6: memref<2x8x256xf32, #tpu.memory_space<vmem>>, %arg7: memref<4x512xf32, #tpu.memory_space<vmem>>, %arg8: memref<72x256xf32, #tpu.memory_space<vmem>>) attributes {dimension_semantics = [#tpu.dimension_semantics<arbitrary>], iteration_bounds = array<i64: 1>, scalar_prefetch = 0 : i64, scratch_operands = 2 : i64, tpu.core_type = #tpu.core_type<tc>, window_params = [{pipeline_mode = #tpu.pipeline_mode<synchronous>, transform_indices = @transform_0, window_bounds = array<i64: 2, 4, 256>}, {pipeline_mode = #tpu.pipeline_mode<synchronous>, transform_indices = @transform_1, window_bounds = array<i64: 8, 72>}, {pipeline_mode = #tpu.pipeline_mode<synchronous>, transform_indices = @transform_2, window_bounds = array<i64: 8, 1>}, {pipeline_mode = #tpu.pipeline_mode<synchronous>, transform_indices = @transform_3, window_bounds = array<i64: 8, 1>}, {transform_indices = @transform_4, window_bounds = array<i64: 1>}, {pipeline_mode = #tpu.pipeline_mode<synchronous>, transform_indices = @transform_5, window_bounds = array<i64: 2, 8, 256>}]} {
    %cst = arith.constant 0.000000e+00 : f32
    %0 = vector.broadcast %cst : f32 to vector<4x512xf32>
    %c0 = arith.constant 0 : index
    %c0_0 = arith.constant 0 : index
    %1 = vector.load %arg7[%c0, %c0_0] : memref<4x512xf32, #tpu.memory_space<vmem>>, vector<4x512xf32>
    tpu.vector_store %arg7[%c0, %c0_0], %0 {strides = array<i32>} : memref<4x512xf32, #tpu.memory_space<vmem>>, vector<4x512xf32>,
    %cst_1 = arith.constant 0.000000e+00 : f32
    %2 = vector.broadcast %cst_1 : f32 to vector<72x256xf32>
    %c0_2 = arith.constant 0 : index
    %c0_3 = arith.constant 0 : index
    %3 = vector.load %arg8[%c0_2, %c0_3] : memref<72x256xf32, #tpu.memory_space<vmem>>, vector<72x256xf32>
    tpu.vector_store %arg8[%c0_2, %c0_3], %2 {strides = array<i32>} : memref<72x256xf32, #tpu.memory_space<vmem>>, vector<72x256xf32>,
    %4 = tpu.iota {dimensions = array<i32: 1>} : vector<1x256xi32>
    %c16_i32 = arith.constant 16 : i32
    %c0_i32 = arith.constant 0 : i32
    %5 = arith.cmpi eq, %c16_i32, %c0_i32 : i32
    %c1_i32 = arith.constant 1 : i32
    %6 = arith.select %5, %c1_i32, %c16_i32 : i32
    %7 = vector.broadcast %6 : i32 to vector<1x256xi32>
    %8 = arith.remsi %4, %7 : vector<1x256xi32>
    %c0_i32_4 = arith.constant 0 : i32
    %9 = vector.broadcast %c0_i32_4 : i32 to vector<1x256xi32>
    %10 = arith.cmpi ne, %8, %9 : vector<1x256xi32>
    %c0_i32_5 = arith.constant 0 : i32
    %11 = vector.broadcast %c0_i32_5 : i32 to vector<1x256xi32>
    %12 = arith.cmpi slt, %8, %11 : vector<1x256xi32>
    %c0_i32_6 = arith.constant 0 : i32
    %13 = arith.cmpi slt, %6, %c0_i32_6 : i32
    %14 = vector.broadcast %13 : i1 to vector<1x256xi1>
    %15 = vector.broadcast %14 : vector<1x256xi1> to vector<1x256xi1>
    %16 = arith.xori %12, %15 : vector<1x256xi1>
    %17 = arith.andi %16, %10 : vector<1x256xi1>
    %18 = vector.broadcast %6 : i32 to vector<1x256xi32>
    %19 = arith.addi %8, %18 : vector<1x256xi32>
    %20 = arith.select %17, %19, %8 : vector<1x256xi1>, vector<1x256xi32>
    %c1_i32_7 = arith.constant 1 : i32
    %21 = vector.broadcast %c1_i32_7 : i32 to vector<1x256xi32>
    %22 = arith.cmpi sge, %20, %21 : vector<1x256xi32>
    %c14_i32 = arith.constant 14 : i32
    %23 = vector.broadcast %c14_i32 : i32 to vector<1x256xi32>
    %24 = arith.cmpi sle, %20, %23 : vector<1x256xi32>
    %c0_8 = arith.constant 0 : index
    %c0_9 = arith.constant 0 : index
    %25 = vector.load %arg2[%c0_8, %c0_9] : memref<8x72xf32, #tpu.memory_space<vmem>>, vector<8x72xf32>
    %cst_10 = arith.constant 0.000000e+00 : f32
    %26 = vector.broadcast %cst_10 : f32 to vector<8x1xf32>
    %c0_11 = arith.constant 0 : index
    %c0_12 = arith.constant 0 : index
    %c0_13 = arith.constant 0 : index
    %27 = vector.load %arg1[%c0_11, %c0_12, %c0_13] : memref<2x4x256xf32, #tpu.memory_space<vmem>>, vector<1x4x256xf32>
    %28 = vector.shape_cast %27 : vector<1x4x256xf32> to vector<4x256xf32>
    %c0_14 = arith.constant 0 : index
    %c128 = arith.constant 128 : index
    %29 = vector.load %arg7[%c0_14, %c128] : memref<4x512xf32, #tpu.memory_space<vmem>>, vector<4x256xf32>
    tpu.vector_store %arg7[%c0_14, %c128], %28 {strides = array<i32>} : memref<4x512xf32, #tpu.memory_space<vmem>>, vector<4x256xf32>,
    %c0_15 = arith.constant 0 : index
    %c0_16 = arith.constant 0 : index
    %30 = vector.load %arg7[%c0_15, %c0_16] : memref<4x512xf32, #tpu.memory_space<vmem>>, vector<4x512xf32>
    %31 = vector.extract_strided_slice %30 {offsets = [0, 111], sizes = [4, 256], strides = [1, 1]} : vector<4x512xf32> to vector<4x256xf32>
    %cst_17 = arith.constant 0.000000e+00 : f32
    %32 = vector.shape_cast %22 : vector<1x256xi1> to vector<1x256xi1>
    %33 = vector.broadcast %32 : vector<1x256xi1> to vector<4x256xi1>
    %34 = vector.broadcast %cst_17 : f32 to vector<4x256xf32>
    %35 = arith.select %33, %31, %34 : vector<4x256xi1>, vector<4x256xf32>
    %c0_18 = arith.constant 0 : index
    %c0_19 = arith.constant 0 : index
    %36 = vector.load %arg8[%c0_18, %c0_19] : memref<72x256xf32, #tpu.memory_space<vmem>>, vector<4x256xf32>
    tpu.vector_store %arg8[%c0_18, %c0_19], %35 {strides = array<i32>} : memref<72x256xf32, #tpu.memory_space<vmem>>, vector<4x256xf32>,
    %37 = vector.extract_strided_slice %30 {offsets = [0, 112], sizes = [4, 256], strides = [1, 1]} : vector<4x512xf32> to vector<4x256xf32>
    %c8 = arith.constant 8 : index
    %c0_20 = arith.constant 0 : index
    %38 = vector.load %arg8[%c8, %c0_20] : memref<72x256xf32, #tpu.memory_space<vmem>>, vector<4x256xf32>
    tpu.vector_store %arg8[%c8, %c0_20], %37 {strides = array<i32>} : memref<72x256xf32, #tpu.memory_space<vmem>>, vector<4x256xf32>,
    %39 = vector.extract_strided_slice %30 {offsets = [0, 113], sizes = [4, 256], strides = [1, 1]} : vector<4x512xf32> to vector<4x256xf32>
    %cst_21 = arith.constant 0.000000e+00 : f32
    %40 = vector.shape_cast %24 : vector<1x256xi1> to vector<1x256xi1>
    %41 = vector.broadcast %40 : vector<1x256xi1> to vector<4x256xi1>
    %42 = vector.broadcast %cst_21 : f32 to vector<4x256xf32>
    %43 = arith.select %41, %39, %42 : vector<4x256xi1>, vector<4x256xf32>
    %c16 = arith.constant 16 : index
    %c0_22 = arith.constant 0 : index
    %44 = vector.load %arg8[%c16, %c0_22] : memref<72x256xf32, #tpu.memory_space<vmem>>, vector<4x256xf32>
    tpu.vector_store %arg8[%c16, %c0_22], %43 {strides = array<i32>} : memref<72x256xf32, #tpu.memory_space<vmem>>, vector<4x256xf32>,
    %45 = vector.extract_strided_slice %30 {offsets = [0, 127], sizes = [4, 256], strides = [1, 1]} : vector<4x512xf32> to vector<4x256xf32>
    %cst_23 = arith.constant 0.000000e+00 : f32
    %46 = vector.shape_cast %22 : vector<1x256xi1> to vector<1x256xi1>
    %47 = vector.broadcast %46 : vector<1x256xi1> to vector<4x256xi1>
    %48 = vector.broadcast %cst_23 : f32 to vector<4x256xf32>
    %49 = arith.select %47, %45, %48 : vector<4x256xi1>, vector<4x256xf32>
    %c24 = arith.constant 24 : index
    %c0_24 = arith.constant 0 : index
    %50 = vector.load %arg8[%c24, %c0_24] : memref<72x256xf32, #tpu.memory_space<vmem>>, vector<4x256xf32>
    tpu.vector_store %arg8[%c24, %c0_24], %49 {strides = array<i32>} : memref<72x256xf32, #tpu.memory_space<vmem>>, vector<4x256xf32>,
    %51 = vector.extract_strided_slice %30 {offsets = [0, 128], sizes = [4, 256], strides = [1, 1]} : vector<4x512xf32> to vector<4x256xf32>
    %c32 = arith.constant 32 : index
    %c0_25 = arith.constant 0 : index
    %52 = vector.load %arg8[%c32, %c0_25] : memref<72x256xf32, #tpu.memory_space<vmem>>, vector<4x256xf32>
    tpu.vector_store %arg8[%c32, %c0_25], %51 {strides = array<i32>} : memref<72x256xf32, #tpu.memory_space<vmem>>, vector<4x256xf32>,
    %53 = vector.extract_strided_slice %30 {offsets = [0, 129], sizes = [4, 256], strides = [1, 1]} : vector<4x512xf32> to vector<4x256xf32>
    %cst_26 = arith.constant 0.000000e+00 : f32
    %54 = vector.shape_cast %24 : vector<1x256xi1> to vector<1x256xi1>
    %55 = vector.broadcast %54 : vector<1x256xi1> to vector<4x256xi1>
    %56 = vector.broadcast %cst_26 : f32 to vector<4x256xf32>
    %57 = arith.select %55, %53, %56 : vector<4x256xi1>, vector<4x256xf32>
    %c40 = arith.constant 40 : index
    %c0_27 = arith.constant 0 : index
    %58 = vector.load %arg8[%c40, %c0_27] : memref<72x256xf32, #tpu.memory_space<vmem>>, vector<4x256xf32>
    tpu.vector_store %arg8[%c40, %c0_27], %57 {strides = array<i32>} : memref<72x256xf32, #tpu.memory_space<vmem>>, vector<4x256xf32>,
    %59 = vector.extract_strided_slice %30 {offsets = [0, 143], sizes = [4, 256], strides = [1, 1]} : vector<4x512xf32> to vector<4x256xf32>
    %cst_28 = arith.constant 0.000000e+00 : f32
    %60 = vector.shape_cast %22 : vector<1x256xi1> to vector<1x256xi1>
    %61 = vector.broadcast %60 : vector<1x256xi1> to vector<4x256xi1>
    %62 = vector.broadcast %cst_28 : f32 to vector<4x256xf32>
    %63 = arith.select %61, %59, %62 : vector<4x256xi1>, vector<4x256xf32>
    %c48 = arith.constant 48 : index
    %c0_29 = arith.constant 0 : index
    %64 = vector.load %arg8[%c48, %c0_29] : memref<72x256xf32, #tpu.memory_space<vmem>>, vector<4x256xf32>
    tpu.vector_store %arg8[%c48, %c0_29], %63 {strides = array<i32>} : memref<72x256xf32, #tpu.memory_space<vmem>>, vector<4x256xf32>,
    %65 = vector.extract_strided_slice %30 {offsets = [0, 144], sizes = [4, 256], strides = [1, 1]} : vector<4x512xf32> to vector<4x256xf32>
    %c56 = arith.constant 56 : index
    %c0_30 = arith.constant 0 : index
    %66 = vector.load %arg8[%c56, %c0_30] : memref<72x256xf32, #tpu.memory_space<vmem>>, vector<4x256xf32>
    tpu.vector_store %arg8[%c56, %c0_30], %65 {strides = array<i32>} : memref<72x256xf32, #tpu.memory_space<vmem>>, vector<4x256xf32>,
    %67 = vector.extract_strided_slice %30 {offsets = [0, 145], sizes = [4, 256], strides = [1, 1]} : vector<4x512xf32> to vector<4x256xf32>
    %cst_31 = arith.constant 0.000000e+00 : f32
    %68 = vector.shape_cast %24 : vector<1x256xi1> to vector<1x256xi1>
    %69 = vector.broadcast %68 : vector<1x256xi1> to vector<4x256xi1>
    %70 = vector.broadcast %cst_31 : f32 to vector<4x256xf32>
    %71 = arith.select %69, %67, %70 : vector<4x256xi1>, vector<4x256xf32>
    %c64 = arith.constant 64 : index
    %c0_32 = arith.constant 0 : index
    %72 = vector.load %arg8[%c64, %c0_32] : memref<72x256xf32, #tpu.memory_space<vmem>>, vector<4x256xf32>
    tpu.vector_store %arg8[%c64, %c0_32], %71 {strides = array<i32>} : memref<72x256xf32, #tpu.memory_space<vmem>>, vector<4x256xf32>,
    %c0_33 = arith.constant 0 : index
    %c0_34 = arith.constant 0 : index
    %73 = vector.load %arg8[%c0_33, %c0_34] : memref<72x256xf32, #tpu.memory_space<vmem>>, vector<72x256xf32>
    %cst_35 = arith.constant dense<0.000000e+00> : vector<8x256xf32>
    %74 = tpu.matmul %25, %73, %cst_35 {dimension_numbers = #tpu.dot_dimension_numbers<[1], [0], [0], [1], [0, 0, 1, 1], [], []>} : vector<8x72xf32>, vector<72x256xf32>, vector<8x256xf32> -> vector<8x256xf32>
    %c0_36 = arith.constant 0 : index
    %c0_37 = arith.constant 0 : index
    %c0_38 = arith.constant 0 : index
    %75 = vector.load %arg6[%c0_36, %c0_37, %c0_38] : memref<2x8x256xf32, #tpu.memory_space<vmem>>, vector<1x8x256xf32>
    %76 = vector.shape_cast %75 : vector<1x8x256xf32> to vector<8x256xf32>
    %77 = vector.shape_cast %74 : vector<8x256xf32> to vector<1x8x256xf32>
    tpu.vector_store %arg6[%c0_36, %c0_37, %c0_38], %77 {strides = array<i32>} : memref<2x8x256xf32, #tpu.memory_space<vmem>>, vector<1x8x256xf32>,
    %cst_39 = arith.constant dense<0.000000e+00> : vector<8xf32>
    %78 = vector.multi_reduction <add>, %74, %cst_39 [1] : vector<8x256xf32> to vector<8xf32>
    %79 = vector.shape_cast %78 : vector<8xf32> to vector<8x1xf32>
    %80 = arith.addf %26, %79 : vector<8x1xf32>
    %c1 = arith.constant 1 : index
    %c0_40 = arith.constant 0 : index
    %c0_41 = arith.constant 0 : index
    %81 = vector.load %arg1[%c1, %c0_40, %c0_41] : memref<2x4x256xf32, #tpu.memory_space<vmem>>, vector<1x4x256xf32>
    %82 = vector.shape_cast %81 : vector<1x4x256xf32> to vector<4x256xf32>
    %c0_42 = arith.constant 0 : index
    %c128_43 = arith.constant 128 : index
    %83 = vector.load %arg7[%c0_42, %c128_43] : memref<4x512xf32, #tpu.memory_space<vmem>>, vector<4x256xf32>
    tpu.vector_store %arg7[%c0_42, %c128_43], %82 {strides = array<i32>} : memref<4x512xf32, #tpu.memory_space<vmem>>, vector<4x256xf32>,
    %c0_44 = arith.constant 0 : index
    %c0_45 = arith.constant 0 : index
    %84 = vector.load %arg7[%c0_44, %c0_45] : memref<4x512xf32, #tpu.memory_space<vmem>>, vector<4x512xf32>
    %85 = vector.extract_strided_slice %84 {offsets = [0, 111], sizes = [4, 256], strides = [1, 1]} : vector<4x512xf32> to vector<4x256xf32>
    %cst_46 = arith.constant 0.000000e+00 : f32
    %86 = vector.shape_cast %22 : vector<1x256xi1> to vector<1x256xi1>
    %87 = vector.broadcast %86 : vector<1x256xi1> to vector<4x256xi1>
    %88 = vector.broadcast %cst_46 : f32 to vector<4x256xf32>
    %89 = arith.select %87, %85, %88 : vector<4x256xi1>, vector<4x256xf32>
    %c0_47 = arith.constant 0 : index
    %c0_48 = arith.constant 0 : index
    %90 = vector.load %arg8[%c0_47, %c0_48] : memref<72x256xf32, #tpu.memory_space<vmem>>, vector<4x256xf32>
    tpu.vector_store %arg8[%c0_47, %c0_48], %89 {strides = array<i32>} : memref<72x256xf32, #tpu.memory_space<vmem>>, vector<4x256xf32>,
    %91 = vector.extract_strided_slice %84 {offsets = [0, 112], sizes = [4, 256], strides = [1, 1]} : vector<4x512xf32> to vector<4x256xf32>
    %c8_49 = arith.constant 8 : index
    %c0_50 = arith.constant 0 : index
    %92 = vector.load %arg8[%c8_49, %c0_50] : memref<72x256xf32, #tpu.memory_space<vmem>>, vector<4x256xf32>
    tpu.vector_store %arg8[%c8_49, %c0_50], %91 {strides = array<i32>} : memref<72x256xf32, #tpu.memory_space<vmem>>, vector<4x256xf32>,
    %93 = vector.extract_strided_slice %84 {offsets = [0, 113], sizes = [4, 256], strides = [1, 1]} : vector<4x512xf32> to vector<4x256xf32>
    %cst_51 = arith.constant 0.000000e+00 : f32
    %94 = vector.shape_cast %24 : vector<1x256xi1> to vector<1x256xi1>
    %95 = vector.broadcast %94 : vector<1x256xi1> to vector<4x256xi1>
    %96 = vector.broadcast %cst_51 : f32 to vector<4x256xf32>
    %97 = arith.select %95, %93, %96 : vector<4x256xi1>, vector<4x256xf32>
    %c16_52 = arith.constant 16 : index
    %c0_53 = arith.constant 0 : index
    %98 = vector.load %arg8[%c16_52, %c0_53] : memref<72x256xf32, #tpu.memory_space<vmem>>, vector<4x256xf32>
    tpu.vector_store %arg8[%c16_52, %c0_53], %97 {strides = array<i32>} : memref<72x256xf32, #tpu.memory_space<vmem>>, vector<4x256xf32>,
    %99 = vector.extract_strided_slice %84 {offsets = [0, 127], sizes = [4, 256], strides = [1, 1]} : vector<4x512xf32> to vector<4x256xf32>
    %cst_54 = arith.constant 0.000000e+00 : f32
    %100 = vector.shape_cast %22 : vector<1x256xi1> to vector<1x256xi1>
    %101 = vector.broadcast %100 : vector<1x256xi1> to vector<4x256xi1>
    %102 = vector.broadcast %cst_54 : f32 to vector<4x256xf32>
    %103 = arith.select %101, %99, %102 : vector<4x256xi1>, vector<4x256xf32>
    %c24_55 = arith.constant 24 : index
    %c0_56 = arith.constant 0 : index
    %104 = vector.load %arg8[%c24_55, %c0_56] : memref<72x256xf32, #tpu.memory_space<vmem>>, vector<4x256xf32>
    tpu.vector_store %arg8[%c24_55, %c0_56], %103 {strides = array<i32>} : memref<72x256xf32, #tpu.memory_space<vmem>>, vector<4x256xf32>,
    %105 = vector.extract_strided_slice %84 {offsets = [0, 128], sizes = [4, 256], strides = [1, 1]} : vector<4x512xf32> to vector<4x256xf32>
    %c32_57 = arith.constant 32 : index
    %c0_58 = arith.constant 0 : index
    %106 = vector.load %arg8[%c32_57, %c0_58] : memref<72x256xf32, #tpu.memory_space<vmem>>, vector<4x256xf32>
    tpu.vector_store %arg8[%c32_57, %c0_58], %105 {strides = array<i32>} : memref<72x256xf32, #tpu.memory_space<vmem>>, vector<4x256xf32>,
    %107 = vector.extract_strided_slice %84 {offsets = [0, 129], sizes = [4, 256], strides = [1, 1]} : vector<4x512xf32> to vector<4x256xf32>
    %cst_59 = arith.constant 0.000000e+00 : f32
    %108 = vector.shape_cast %24 : vector<1x256xi1> to vector<1x256xi1>
    %109 = vector.broadcast %108 : vector<1x256xi1> to vector<4x256xi1>
    %110 = vector.broadcast %cst_59 : f32 to vector<4x256xf32>
    %111 = arith.select %109, %107, %110 : vector<4x256xi1>, vector<4x256xf32>
    %c40_60 = arith.constant 40 : index
    %c0_61 = arith.constant 0 : index
    %112 = vector.load %arg8[%c40_60, %c0_61] : memref<72x256xf32, #tpu.memory_space<vmem>>, vector<4x256xf32>
    tpu.vector_store %arg8[%c40_60, %c0_61], %111 {strides = array<i32>} : memref<72x256xf32, #tpu.memory_space<vmem>>, vector<4x256xf32>,
    %113 = vector.extract_strided_slice %84 {offsets = [0, 143], sizes = [4, 256], strides = [1, 1]} : vector<4x512xf32> to vector<4x256xf32>
    %cst_62 = arith.constant 0.000000e+00 : f32
    %114 = vector.shape_cast %22 : vector<1x256xi1> to vector<1x256xi1>
    %115 = vector.broadcast %114 : vector<1x256xi1> to vector<4x256xi1>
    %116 = vector.broadcast %cst_62 : f32 to vector<4x256xf32>
    %117 = arith.select %115, %113, %116 : vector<4x256xi1>, vector<4x256xf32>
    %c48_63 = arith.constant 48 : index
    %c0_64 = arith.constant 0 : index
    %118 = vector.load %arg8[%c48_63, %c0_64] : memref<72x256xf32, #tpu.memory_space<vmem>>, vector<4x256xf32>
    tpu.vector_store %arg8[%c48_63, %c0_64], %117 {strides = array<i32>} : memref<72x256xf32, #tpu.memory_space<vmem>>, vector<4x256xf32>,
    %119 = vector.extract_strided_slice %84 {offsets = [0, 144], sizes = [4, 256], strides = [1, 1]} : vector<4x512xf32> to vector<4x256xf32>
    %c56_65 = arith.constant 56 : index
    %c0_66 = arith.constant 0 : index
    %120 = vector.load %arg8[%c56_65, %c0_66] : memref<72x256xf32, #tpu.memory_space<vmem>>, vector<4x256xf32>
    tpu.vector_store %arg8[%c56_65, %c0_66], %119 {strides = array<i32>} : memref<72x256xf32, #tpu.memory_space<vmem>>, vector<4x256xf32>,
    %121 = vector.extract_strided_slice %84 {offsets = [0, 145], sizes = [4, 256], strides = [1, 1]} : vector<4x512xf32> to vector<4x256xf32>
    %cst_67 = arith.constant 0.000000e+00 : f32
    %122 = vector.shape_cast %24 : vector<1x256xi1> to vector<1x256xi1>
    %123 = vector.broadcast %122 : vector<1x256xi1> to vector<4x256xi1>
    %124 = vector.broadcast %cst_67 : f32 to vector<4x256xf32>
    %125 = arith.select %123, %121, %124 : vector<4x256xi1>, vector<4x256xf32>
    %c64_68 = arith.constant 64 : index
    %c0_69 = arith.constant 0 : index
    %126 = vector.load %arg8[%c64_68, %c0_69] : memref<72x256xf32, #tpu.memory_space<vmem>>, vector<4x256xf32>
    tpu.vector_store %arg8[%c64_68, %c0_69], %125 {strides = array<i32>} : memref<72x256xf32, #tpu.memory_space<vmem>>, vector<4x256xf32>,
    %c0_70 = arith.constant 0 : index
    %c0_71 = arith.constant 0 : index
    %127 = vector.load %arg8[%c0_70, %c0_71] : memref<72x256xf32, #tpu.memory_space<vmem>>, vector<72x256xf32>
    %cst_72 = arith.constant dense<0.000000e+00> : vector<8x256xf32>
    %128 = tpu.matmul %25, %127, %cst_72 {dimension_numbers = #tpu.dot_dimension_numbers<[1], [0], [0], [1], [0, 0, 1, 1], [], []>} : vector<8x72xf32>, vector<72x256xf32>, vector<8x256xf32> -> vector<8x256xf32>
    %c1_73 = arith.constant 1 : index
    %c0_74 = arith.constant 0 : index
    %c0_75 = arith.constant 0 : index
    %129 = vector.load %arg6[%c1_73, %c0_74, %c0_75] : memref<2x8x256xf32, #tpu.memory_space<vmem>>, vector<1x8x256xf32>
    %130 = vector.shape_cast %129 : vector<1x8x256xf32> to vector<8x256xf32>
    %131 = vector.shape_cast %128 : vector<8x256xf32> to vector<1x8x256xf32>
    tpu.vector_store %arg6[%c1_73, %c0_74, %c0_75], %131 {strides = array<i32>} : memref<2x8x256xf32, #tpu.memory_space<vmem>>, vector<1x8x256xf32>,
    %cst_76 = arith.constant dense<0.000000e+00> : vector<8xf32>
    %132 = vector.multi_reduction <add>, %128, %cst_76 [1] : vector<8x256xf32> to vector<8xf32>
    %133 = vector.shape_cast %132 : vector<8xf32> to vector<8x1xf32>
    %134 = arith.addf %80, %133 : vector<8x1xf32>
    %cst_77 = arith.constant 0.001953125 : f32
    %135 = vector.broadcast %cst_77 : f32 to vector<8x1xf32>
    %136 = arith.mulf %134, %135 : vector<8x1xf32>
    %cst_78 = arith.constant 0.000000e+00 : f32
    %137 = vector.broadcast %cst_78 : f32 to vector<8x1xf32>
    %c0_79 = arith.constant 0 : index
    %c0_80 = arith.constant 0 : index
    %c0_81 = arith.constant 0 : index
    %138 = vector.load %arg6[%c0_79, %c0_80, %c0_81] : memref<2x8x256xf32, #tpu.memory_space<vmem>>, vector<1x8x256xf32>
    %139 = vector.shape_cast %138 : vector<1x8x256xf32> to vector<8x256xf32>
    %140 = vector.broadcast %136 : vector<8x1xf32> to vector<8x256xf32>
    %141 = arith.subf %139, %140 : vector<8x256xf32>
    %142 = arith.mulf %141, %141 : vector<8x256xf32>
    %cst_82 = arith.constant dense<0.000000e+00> : vector<8xf32>
    %143 = vector.multi_reduction <add>, %142, %cst_82 [1] : vector<8x256xf32> to vector<8xf32>
    %144 = vector.shape_cast %143 : vector<8xf32> to vector<8x1xf32>
    %145 = arith.addf %137, %144 : vector<8x1xf32>
    %c1_83 = arith.constant 1 : index
    %c0_84 = arith.constant 0 : index
    %c0_85 = arith.constant 0 : index
    %146 = vector.load %arg6[%c1_83, %c0_84, %c0_85] : memref<2x8x256xf32, #tpu.memory_space<vmem>>, vector<1x8x256xf32>
    %147 = vector.shape_cast %146 : vector<1x8x256xf32> to vector<8x256xf32>
    %148 = vector.broadcast %136 : vector<8x1xf32> to vector<8x256xf32>
    %149 = arith.subf %147, %148 : vector<8x256xf32>
    %150 = arith.mulf %149, %149 : vector<8x256xf32>
    %cst_86 = arith.constant dense<0.000000e+00> : vector<8xf32>
    %151 = vector.multi_reduction <add>, %150, %cst_86 [1] : vector<8x256xf32> to vector<8xf32>
    %152 = vector.shape_cast %151 : vector<8xf32> to vector<8x1xf32>
    %153 = arith.addf %145, %152 : vector<8x1xf32>
    %cst_87 = arith.constant 0.001953125 : f32
    %154 = vector.broadcast %cst_87 : f32 to vector<8x1xf32>
    %155 = arith.mulf %153, %154 : vector<8x1xf32>
    %c0_88 = arith.constant 0 : index
    %c0_89 = arith.constant 0 : index
    %156 = vector.load %arg3[%c0_88, %c0_89] : memref<8x1xf32, #tpu.memory_space<vmem>>, vector<8x1xf32>
    %cst_90 = arith.constant 9.99999974E-6 : f32
    %157 = vector.broadcast %cst_90 : f32 to vector<8x1xf32>
    %158 = arith.addf %155, %157 : vector<8x1xf32>
    %159 = math.rsqrt %158 : vector<8x1xf32>
    %160 = arith.mulf %156, %159 : vector<8x1xf32>
    %c0_91 = arith.constant 0 : index
    %c0_92 = arith.constant 0 : index
    %161 = vector.load %arg4[%c0_91, %c0_92] : memref<8x1xf32, #tpu.memory_space<vmem>>, vector<8x1xf32>
    %162 = arith.mulf %136, %160 : vector<8x1xf32>
    %163 = arith.subf %161, %162 : vector<8x1xf32>
    %c0_93 = arith.constant 0 : index
    %164 = memref.load %arg5[%c0_93] : memref<1xf32, #tpu.memory_space<smem>>
    %c0_94 = arith.constant 0 : index
    %c0_95 = arith.constant 0 : index
    %c0_96 = arith.constant 0 : index
    %165 = vector.load %arg6[%c0_94, %c0_95, %c0_96] : memref<2x8x256xf32, #tpu.memory_space<vmem>>, vector<1x8x256xf32>
    %166 = vector.shape_cast %165 : vector<1x8x256xf32> to vector<8x256xf32>
    %167 = vector.broadcast %160 : vector<8x1xf32> to vector<8x256xf32>
    %168 = arith.mulf %166, %167 : vector<8x256xf32>
    %169 = vector.broadcast %163 : vector<8x1xf32> to vector<8x256xf32>
    %170 = arith.addf %168, %169 : vector<8x256xf32>
    %cst_97 = arith.constant 0.000000e+00 : f32
    %171 = vector.broadcast %cst_97 : f32 to vector<8x256xf32>
    %172 = arith.cmpf oge, %170, %171 : vector<8x256xf32>
    %173 = vector.broadcast %164 : f32 to vector<8x256xf32>
    %174 = arith.mulf %173, %170 : vector<8x256xf32>
    %175 = arith.select %172, %170, %174 : vector<8x256xi1>, vector<8x256xf32>
    %c0_98 = arith.constant 0 : index
    %c0_99 = arith.constant 0 : index
    %c0_100 = arith.constant 0 : index
    %176 = vector.load %arg6[%c0_98, %c0_99, %c0_100] : memref<2x8x256xf32, #tpu.memory_space<vmem>>, vector<1x8x256xf32>
    %177 = vector.shape_cast %176 : vector<1x8x256xf32> to vector<8x256xf32>
    %178 = vector.shape_cast %175 : vector<8x256xf32> to vector<1x8x256xf32>
    tpu.vector_store %arg6[%c0_98, %c0_99, %c0_100], %178 {strides = array<i32>} : memref<2x8x256xf32, #tpu.memory_space<vmem>>, vector<1x8x256xf32>,
    %c1_101 = arith.constant 1 : index
    %c0_102 = arith.constant 0 : index
    %c0_103 = arith.constant 0 : index
    %179 = vector.load %arg6[%c1_101, %c0_102, %c0_103] : memref<2x8x256xf32, #tpu.memory_space<vmem>>, vector<1x8x256xf32>
    %180 = vector.shape_cast %179 : vector<1x8x256xf32> to vector<8x256xf32>
    %181 = vector.broadcast %160 : vector<8x1xf32> to vector<8x256xf32>
    %182 = arith.mulf %180, %181 : vector<8x256xf32>
    %183 = vector.broadcast %163 : vector<8x1xf32> to vector<8x256xf32>
    %184 = arith.addf %182, %183 : vector<8x256xf32>
    %cst_104 = arith.constant 0.000000e+00 : f32
    %185 = vector.broadcast %cst_104 : f32 to vector<8x256xf32>
    %186 = arith.cmpf oge, %184, %185 : vector<8x256xf32>
    %187 = vector.broadcast %164 : f32 to vector<8x256xf32>
    %188 = arith.mulf %187, %184 : vector<8x256xf32>
    %189 = arith.select %186, %184, %188 : vector<8x256xi1>, vector<8x256xf32>
    %c1_105 = arith.constant 1 : index
    %c0_106 = arith.constant 0 : index
    %c0_107 = arith.constant 0 : index
    %190 = vector.load %arg6[%c1_105, %c0_106, %c0_107] : memref<2x8x256xf32, #tpu.memory_space<vmem>>, vector<1x8x256xf32>
    %191 = vector.shape_cast %190 : vector<1x8x256xf32> to vector<8x256xf32>
    %192 = vector.shape_cast %189 : vector<8x256xf32> to vector<1x8x256xf32>
    tpu.vector_store %arg6[%c1_105, %c0_106, %c0_107], %192 {strides = array<i32>} : memref<2x8x256xf32, #tpu.memory_space<vmem>>, vector<1x8x256xf32>,
    return
  }
  func.func @transform_0(%arg0: i32) -> (i32, i32, i32) {
    %c0_i32 = arith.constant 0 : i32
    %c0_i32_0 = arith.constant 0 : i32
    %c0_i32_1 = arith.constant 0 : i32
    %c0_i32_2 = arith.constant 0 : i32
    return %c0_i32, %c0_i32_0, %c0_i32_1 : i32, i32, i32
  }
  func.func @transform_1(%arg0: i32) -> (i32, i32) {
    %c0_i32 = arith.constant 0 : i32
    %c0_i32_0 = arith.constant 0 : i32
    %c0_i32_1 = arith.constant 0 : i32
    return %c0_i32, %c0_i32_0 : i32, i32
  }
  func.func @transform_2(%arg0: i32) -> (i32, i32) {
    %c0_i32 = arith.constant 0 : i32
    %c0_i32_0 = arith.constant 0 : i32
    %c0_i32_1 = arith.constant 0 : i32
    return %c0_i32, %c0_i32_0 : i32, i32
  }
  func.func @transform_3(%arg0: i32) -> (i32, i32) {
    %c0_i32 = arith.constant 0 : i32
    %c0_i32_0 = arith.constant 0 : i32
    %c0_i32_1 = arith.constant 0 : i32
    return %c0_i32, %c0_i32_0 : i32, i32
  }
  func.func @transform_4(%arg0: i32) -> i32 {
    %c0_i32 = arith.constant 0 : i32
    %c0_i32_0 = arith.constant 0 : i32
    return %c0_i32 : i32
  }
  func.func @transform_5(%arg0: i32) -> (i32, i32, i32) {
    %c0_i32 = arith.constant 0 : i32
    %c0_i32_0 = arith.constant 0 : i32
    %c0_i32_1 = arith.constant 0 : i32
    %c0_i32_2 = arith.constant 0 : i32
    return %c0_i32, %c0_i32_0, %c0_i32_1 : i32, i32, i32
  }
}

</mosaic_0001>

<llo_original>
// kernel: tpu_custom_call.1
$region0: #{tpu_custom_call.1}
  #allocation0 [shape = 'u32[]', space=smem, size = 0x4, offset = 0x4, fixed_abs, tag = 'smem constant byte address 0x4 - core index']
  #allocation1 [shape = 'u32[144,128]{1,0:T(1,128)}', space=vmem, size = 0x12000, scoped, tag = 'internal scratch']
  #allocation2 [shape = 'f32[4,512]{1,0:T(4,128)}', space=vmem, size = 0x2000, scoped, tag = 'scratch operand']
  #allocation3 [shape = 'f32[72,256]{1,0:T(8,128)}', space=vmem, size = 0x12000, scoped, tag = 'scratch operand']
  #allocation4 [shape = 'f32[1]{0:T(128)S(6)}', space=smem, size = 0x200, scoped, tag = 'scoped memory for tpu_custom_call.1']
  %s0 = inlined_call_operand.vmem [shape: f32[2,4,256], index: 0, kind: input, shape index: {}]
  %s1 = inlined_call_operand.vmem [shape: f32[8,72], index: 1, kind: input, shape index: {}]
  %s2 = inlined_call_operand.vmem [shape: f32[8,1], index: 2, kind: input, shape index: {}]
  %s3 = inlined_call_operand.vmem [shape: f32[8,1], index: 3, kind: input, shape index: {}]
  %s4 = inlined_call_operand.<no memory space> [shape: f32[1], index: 4, kind: input, shape index: {}]
  %s5 = inlined_call_operand.hbm [shape: f32[2,8,256], index: 5, kind: output, shape index: {}]
  %s6 = sld [smem:[#allocation0]]
  $region30: #{tpu_custom_call.1} parent=0
    _
  %s8 = ssub.s32 1, %s6
  %s9 = scalar_select 0, %s8, %s6
  %10 = sst [smem:[#allocation4]] %s4
  $region1: #{tpu_custom_call.1} parent=0
    #allocation5 [shape = 'u8[16384]{0}', space=vmem, size = 0x4000, scoped, tag = 'output window, operand 0, single buffered']
    #allocation6 [shape = 's32[1]{0}', space=sflag, size = 0x4, scoped, tag = 'scoped memory for tpu_custom_call.1']
    %11 = vsyncpa [#allocation6], 0
    // Predicated region
    $region2: #{tpu_custom_call.1} parent=1 // pred_check
      _
    $region3: #{tpu_custom_call.1} parent=1 // pred_check_branch
      %13 = sbr.rel (0) target = $region5
    $region4: #{tpu_custom_call.1} parent=1 // pred_region
      _
    $region5: #{tpu_custom_call.1} parent=1 // pred_fallthru
      _
    // Predicated region
    $region6: #{tpu_custom_call.1} parent=1 // pred_check
      _
    $region7: #{tpu_custom_call.1} parent=1 // pred_check_branch
      %15 = sbr.rel (0) target = $region9
    $region8: #{tpu_custom_call.1} parent=1 // pred_region
      _
    $region9: #{tpu_custom_call.1} parent=1 // pred_fallthru
      _
    // Predicated region
    $region10: #{tpu_custom_call.1} parent=1 // pred_check
      _
    $region11: #{tpu_custom_call.1} parent=1 // pred_check_branch
      %17 = sbr.rel (0) target = $region13
    $region12: #{tpu_custom_call.1} parent=1 // pred_region
      _
    $region13: #{tpu_custom_call.1} parent=1 // pred_fallthru
      _
    // Predicated region
    $region14: #{tpu_custom_call.1} parent=1 // pred_check
      _
    $region15: #{tpu_custom_call.1} parent=1 // pred_check_branch
      %19 = sbr.rel (0) target = $region17
    $region16: #{tpu_custom_call.1} parent=1 // pred_region
      _
    $region17: #{tpu_custom_call.1} parent=1 // pred_fallthru
      _
    // Predicated region
    $region18: #{tpu_custom_call.1} parent=1 // pred_check
      _
    $region19: #{tpu_custom_call.1} parent=1 // pred_check_branch
      %21 = sbr.rel (0) target = $region21
    $region20: #{tpu_custom_call.1} parent=1 // pred_region
      _
    $region21: #{tpu_custom_call.1} parent=1 // pred_fallthru
      _
    %22 = vst [vmem:[#allocation2] sm:$0xff] 0.0
    %23 = vst [vmem:[#allocation2 + $0x8] sm:$0xff] 0.0
    %24 = vst [vmem:[#allocation3] sm:$0xff] 0.0
    %25 = vst [vmem:[#allocation3 + $0x8] sm:$0xff] 0.0
    %26 = vst [vmem:[#allocation3 + $0x10] sm:$0xff] 0.0
    %27 = vst [vmem:[#allocation3 + $0x18] sm:$0xff] 0.0
    %28 = vst [vmem:[#allocation3 + $0x20] sm:$0xff] 0.0
    %29 = vst [vmem:[#allocation3 + $0x28] sm:$0xff] 0.0
    %30 = vst [vmem:[#allocation3 + $0x30] sm:$0xff] 0.0
    %31 = vst [vmem:[#allocation3 + $0x38] sm:$0xff] 0.0
    %32 = vst [vmem:[#allocation3 + $0x40] sm:$0xff] 0.0
    %33 = vst [vmem:[#allocation3 + $0x48] sm:$0xff] 0.0
    %34 = vst [vmem:[#allocation3 + $0x50] sm:$0xff] 0.0
    %35 = vst [vmem:[#allocation3 + $0x58] sm:$0xff] 0.0
    %36 = vst [vmem:[#allocation3 + $0x60] sm:$0xff] 0.0
    %37 = vst [vmem:[#allocation3 + $0x68] sm:$0xff] 0.0
    %38 = vst [vmem:[#allocation3 + $0x70] sm:$0xff] 0.0
    %39 = vst [vmem:[#allocation3 + $0x78] sm:$0xff] 0.0
    %40 = vst [vmem:[#allocation3 + $0x80] sm:$0xff] 0.0
    %41 = vst [vmem:[#allocation3 + $0x88] sm:$0xff] 0.0
    %v42 = vlaneseq
    %v43 = vand.u32 %v42, 127
    %v44 = vadd.s32 %v43, 128
    %vm45 = vcmp.lt.s32.totalorder %v43, 0
    %v46 = vsub.s32 0, %v43
    %v47 = vsel %vm45, %v46, %v43
    %v48 = vshrl.u32 %v47, 4
    %v49 = vand.u32 %v47, 15
    %v50 = vsub.s32 0, %v49
    %v51 = vsel %vm45, %v50, %v49
    %vm52 = vcmp.lt.s32.totalorder %v44, 0
    %v53 = vsub.s32 0, %v44
    %v54 = vsel %vm52, %v53, %v44
    %v55 = vshrl.u32 %v54, 4
    %v56 = vand.u32 %v54, 15
    %v57 = vsub.s32 0, %v56
    %v58 = vsel %vm52, %v57, %v56
    %vm59 = vcmp.ne.s32.totalorder %v51, 0
    %vm60 = vcmp.ne.s32.totalorder %v58, 0
    %vm61 = vcmp.lt.s32.totalorder %v51, 0
    %vm62 = vcmp.lt.s32.totalorder %v58, 0
    %vm63 = vmand %vm61, %vm59
    %vm64 = vmand %vm62, %vm60
    %v65 = vadd.s32 %v51, 16
    %v66 = vadd.s32 %v58, 16
    %v67 = vsel %vm63, %v65, %v51
    %v68 = vsel %vm64, %v66, %v58
    %vm69 = vcmp.ge.s32.totalorder %v67, 1
    %vm70 = vcmp.ge.s32.totalorder %v68, 1
    %vm71 = vcmp.le.s32.totalorder %v67, 14
    %vm72 = vcmp.le.s32.totalorder %v68, 14
    %v73 = vld [vmem:[%s1] sm:$0xff]
    %v74 = vld [vmem:[%s0] sm:$0xff]
    %75 = vst [vmem:[#allocation2 + $0x4] sm:$0xff] %v74
    %v76 = vld [vmem:[#allocation2] sm:$0xff]
    %v77 = vld [vmem:[#allocation2 + $0x8] sm:$0xff]
    %v78 = vsel %vm69, 1, 0
    %v79 = vsel %vm70, 1, 0
    %vm80 = vcmp.eq.s32.totalorder %v78, 1
    %vm81 = vcmp.eq.s32.totalorder %v79, 1
    %v84 = vcombine.high %v76, %v76
    %85 = vrot.lane.b32.xlu0 %v76, 17
    %v86 = vpop.permute.xlu0 %85
    %87 = vrot.lane.b32.xlu0 %v84, 17
    %v88 = vpop.permute.xlu0 %87
    %89 = vrot.lane.b32.xlu0 %v77, 17
    %v90 = vpop.permute.xlu0 %89
    %vm91 = vcmask 138240
    %v92 = vsel %vm91, %v86, %v88
    %v93 = vsel %vm91, %v88, %v90
    %v96 = vsel %vm80, %v92, 0.0
    %v97 = vsel %vm81, %v93, 0.0
    %98 = vst [vmem:[#allocation3] sm:$0xf] %v96
    %99 = vst [vmem:[#allocation3 + $0x8] sm:$0xf] %v97
    %100 = vrot.lane.b32.xlu0 %v76, 16
    %v101 = vpop.permute.xlu0 %100
    %102 = vrot.lane.b32.xlu0 %v84, 16
    %v103 = vpop.permute.xlu0 %102
    %104 = vrot.lane.b32.xlu0 %v77, 16
    %v105 = vpop.permute.xlu0 %104
    %vm106 = vcmask 130048
    %v107 = vsel %vm106, %v101, %v103
    %v108 = vsel %vm106, %v103, %v105
    %111 = vst [vmem:[#allocation3 + $0x10] sm:$0xf] %v107
    %112 = vst [vmem:[#allocation3 + $0x18] sm:$0xf] %v108
    %v113 = vsel %vm71, 1, 0
    %v114 = vsel %vm72, 1, 0
    %vm115 = vcmp.eq.s32.totalorder %v113, 1
    %vm116 = vcmp.eq.s32.totalorder %v114, 1
    %117 = vrot.lane.b32.xlu0 %v76, 15
    %v118 = vpop.permute.xlu0 %117
    %119 = vrot.lane.b32.xlu0 %v84, 15
    %v120 = vpop.permute.xlu0 %119
    %121 = vrot.lane.b32.xlu0 %v77, 15
    %v122 = vpop.permute.xlu0 %121
    %vm123 = vcmask 121856
    %v124 = vsel %vm123, %v118, %v120
    %v125 = vsel %vm123, %v120, %v122
    %v128 = vsel %vm115, %v124, 0.0
    %v129 = vsel %vm116, %v125, 0.0
    %130 = vst [vmem:[#allocation3 + $0x20] sm:$0xf] %v128
    %131 = vst [vmem:[#allocation3 + $0x28] sm:$0xf] %v129
    %132 = vrot.lane.b32.xlu0 %v76, 1
    %v133 = vpop.permute.xlu0 %132
    %134 = vrot.lane.b32.xlu0 %v84, 1
    %v135 = vpop.permute.xlu0 %134
    %136 = vrot.lane.b32.xlu0 %v77, 1
    %v137 = vpop.permute.xlu0 %136
    %vm138 = vcmask 7168
    %v139 = vsel %vm138, %v133, %v135
    %v140 = vsel %vm138, %v135, %v137
    %v143 = vsel %vm80, %v139, 0.0
    %v144 = vsel %vm81, %v140, 0.0
    %145 = vst [vmem:[#allocation3 + $0x30] sm:$0xf] %v143
    %146 = vst [vmem:[#allocation3 + $0x38] sm:$0xf] %v144
    %148 = vst [vmem:[#allocation3 + $0x40] sm:$0xf] %v84
    %149 = vst [vmem:[#allocation3 + $0x48] sm:$0xf] %v77
    %v150 = vcombine.high %v77, %v77
    %151 = vrot.lane.b32.xlu0 %v84, 127
    %v152 = vpop.permute.xlu0 %151
    %153 = vrot.lane.b32.xlu0 %v77, 127
    %v154 = vpop.permute.xlu0 %153
    %155 = vrot.lane.b32.xlu0 %v150, 127
    %v156 = vpop.permute.xlu0 %155
    %vm157 = vcmask 1039360
    %v158 = vsel %vm157, %v152, %v154
    %v159 = vsel %vm157, %v154, %v156
    %v162 = vsel %vm115, %v158, 0.0
    %v163 = vsel %vm116, %v159, 0.0
    %164 = vst [vmem:[#allocation3 + $0x50] sm:$0xf] %v162
    %165 = vst [vmem:[#allocation3 + $0x58] sm:$0xf] %v163
    %166 = vrot.lane.b32.xlu0 %v84, 113
    %v167 = vpop.permute.xlu0 %166
    %168 = vrot.lane.b32.xlu0 %v77, 113
    %v169 = vpop.permute.xlu0 %168
    %170 = vrot.lane.b32.xlu0 %v150, 113
    %v171 = vpop.permute.xlu0 %170
    %vm172 = vcmask 924672
    %v173 = vsel %vm172, %v167, %v169
    %v174 = vsel %vm172, %v169, %v171
    %v177 = vsel %vm80, %v173, 0.0
    %v178 = vsel %vm81, %v174, 0.0
    %179 = vst [vmem:[#allocation3 + $0x60] sm:$0xf] %v177
    %180 = vst [vmem:[#allocation3 + $0x68] sm:$0xf] %v178
    %181 = vrot.lane.b32.xlu0 %v84, 112
    %v182 = vpop.permute.xlu0 %181
    %183 = vrot.lane.b32.xlu0 %v77, 112
    %v184 = vpop.permute.xlu0 %183
    %185 = vrot.lane.b32.xlu0 %v150, 112
    %v186 = vpop.permute.xlu0 %185
    %vm187 = vcmask 916480
    %v188 = vsel %vm187, %v182, %v184
    %v189 = vsel %vm187, %v184, %v186
    %192 = vst [vmem:[#allocation3 + $0x70] sm:$0xf] %v188
    %193 = vst [vmem:[#allocation3 + $0x78] sm:$0xf] %v189
    %194 = vrot.lane.b32.xlu0 %v84, 111
    %v195 = vpop.permute.xlu0 %194
    %196 = vrot.lane.b32.xlu0 %v77, 111
    %v197 = vpop.permute.xlu0 %196
    %198 = vrot.lane.b32.xlu0 %v150, 111
    %v199 = vpop.permute.xlu0 %198
    %vm200 = vcmask 908288
    %v201 = vsel %vm200, %v195, %v197
    %v202 = vsel %vm200, %v197, %v199
    %v205 = vsel %vm115, %v201, 0.0
    %v206 = vsel %vm116, %v202, 0.0
    %207 = vst [vmem:[#allocation3 + $0x80] sm:$0xf] %v205
    %208 = vst [vmem:[#allocation3 + $0x88] sm:$0xf] %v206
    %v209 = vld [vmem:[#allocation3] sm:$0xff]
    %v210 = vld [vmem:[#allocation3 + $0x8] sm:$0xff]
    %v211 = vld [vmem:[#allocation3 + $0x10] sm:$0xff]
    %v212 = vld [vmem:[#allocation3 + $0x18] sm:$0xff]
    %v213 = vld [vmem:[#allocation3 + $0x20] sm:$0xff]
    %v214 = vld [vmem:[#allocation3 + $0x28] sm:$0xff]
    %v215 = vld [vmem:[#allocation3 + $0x30] sm:$0xff]
    %v216 = vld [vmem:[#allocation3 + $0x38] sm:$0xff]
    %v217 = vld [vmem:[#allocation3 + $0x40] sm:$0xff]
    %v218 = vld [vmem:[#allocation3 + $0x48] sm:$0xff]
    %v219 = vld [vmem:[#allocation3 + $0x50] sm:$0xff]
    %v220 = vld [vmem:[#allocation3 + $0x58] sm:$0xff]
    %v221 = vld [vmem:[#allocation3 + $0x60] sm:$0xff]
    %v222 = vld [vmem:[#allocation3 + $0x68] sm:$0xff]
    %v223 = vld [vmem:[#allocation3 + $0x70] sm:$0xff]
    %v224 = vld [vmem:[#allocation3 + $0x78] sm:$0xff]
    %v225 = vld [vmem:[#allocation3 + $0x80] sm:$0xff]
    %v226 = vld [vmem:[#allocation3 + $0x88] sm:$0xff]
    %vm227 = vcmask 588800
    %v229 = vsel %vm227, %v73, 0
    %231 = vmatprep.subr.mxu0 %v210
    %232 = vmatpush1.msra.mxu0 %v209
    %233 = vmatprep.subr.mxu0 %v212
    %234 = vmatpush1.msra.mxu0 %v211
    %235 = vmatprep.subr.mxu0 %v214
    %236 = vmatpush1.msra.mxu0 %v213
    %237 = vmatprep.subr.mxu0 %v216
    %238 = vmatpush1.msra.mxu0 %v215
    %239 = vmatprep.subr.mxu0 %v218
    %240 = vmatpush1.msra.mxu0 %v217
    %241 = vmatprep.subr.mxu0 %v220
    %242 = vmatpush1.msra.mxu0 %v219
    %243 = vmatprep.subr.mxu0 %v222
    %244 = vmatpush1.msra.mxu0 %v221
    %245 = vmatprep.subr.mxu0 %v224
    %246 = vmatpush1.msra.mxu0 %v223
    %247 = vmatprep.subr.mxu0 %v226
    %248 = vmatpush1.msra.mxu0 %v225
    %249 = vmatprep.subr.mxu0 0.0
    %250 = vmatpush1.msra.mxu0 0.0
    %251 = vmatprep.subr.mxu0 0.0
    %252 = vmatpush1.msra.mxu0 0.0
    %253 = vmatprep.subr.mxu0 0.0
    %254 = vmatpush1.msra.mxu0 0.0
    %255 = vmatprep.subr.mxu0 0.0
    %256 = vmatpush1.msra.mxu0 0.0
    %257 = vmatprep.subr.mxu0 0.0
    %258 = vmatpush1.msra.mxu0 0.0
    %259 = vmatprep.subr.mxu0 0.0
    %260 = vmatpush1.msra.mxu0 0.0
    %261 = vmatprep.subr.mxu0 0.0
    %262 = vmatpush1.msra.mxu0 0.0
    %263 = vmatprep.subr.mxu0 0.0
    %264 = vmatpush1.msra.mxu0 0.0
    %265 = vmatprep.subr.mxu0 0.0
    %266 = vmatpush1.msra.mxu0 0.0
    %267 = vmatprep.subr.mxu0 0.0
    %268 = vmatpush1.msra.mxu0 0.0
    %269 = vmatprep.subr.mxu0 0.0
    %270 = vmatpush1.msra.mxu0 0.0
    %271 = vmatprep.subr.mxu0 0.0
    %272 = vmatpush1.msra.mxu0 0.0
    %273 = vmatprep.subr.mxu0 0.0
    %274 = vmatpush1.msra.mxu0 0.0
    %275 = vmatprep.subr.mxu0 0.0
    %276 = vmatpush1.msra.mxu0 0.0
    %277 = vmatprep.subr.mxu0 0.0
    %278 = vmatpush1.msra.mxu0 0.0
    %279 = vmatprep.subr.mxu0 0.0
    %280 = vmatpush1.msra.mxu0 0.0
    %281 = vmatprep.subr.mxu0 0.0
    %282 = vmatpush1.msra.mxu0 0.0
    %283 = vmatprep.subr.mxu0 0.0
    %284 = vmatpush1.msra.mxu0 0.0
    %285 = vmatprep.subr.mxu0 0.0
    %286 = vmatpush1.msra.mxu0 0.0
    %287 = vmatprep.subr.mxu0 0.0
    %288 = vmatpush1.msra.mxu0 0.0
    %289 = vmatprep.subr.mxu0 0.0
    %290 = vmatpush1.msra.mxu0 0.0
    %291 = vmatprep.subr.mxu0 0.0
    %292 = vmatpush1.msra.mxu0 0.0
    %293 = vmatprep.subr.mxu0 0.0
    %294 = vmatpush1.msra.mxu0 0.0
    %295 = vmatprep.mubr.f32.mxu0 0.0
    %296 = vmatmul.mubr.f32.gmra.mrb[0].mxu0 %v229
    %v297 = vpop.f32.mrb[0].mxu0
    %v298 = vadd.f32 0.0, %v297
    %v299 = vpop.f32.mrb[0].mxu0
    %v300 = vadd.f32 0.0, %v299
    %301 = vdwg.mxu0
    %302 = vst [vmem:[#allocation5] sm:$0xff] %v298
    %303 = vst [vmem:[#allocation5 + $0x8] sm:$0xff] %v300
    %v304 = vadd.f32 %v298, %v300
    %305 = vadd.xlane.f32.xlu0 %v304
    %v306 = vpop.xlane.xlu0 %305
    %v307 = vadd.f32 %v306, 0.0
    %s308 = scalar_lea.vmem %s0, 8
    %v309 = vld [vmem:[%s308] sm:$0xff]
    %310 = vst [vmem:[#allocation2 + $0x4] sm:$0xff] %v309
    %v311 = vld [vmem:[#allocation2] sm:$0xff]
    %v312 = vld [vmem:[#allocation2 + $0x8] sm:$0xff]
    %v315 = vcombine.high %v311, %v311
    %316 = vrot.lane.b32.xlu0 %v311, 17
    %v317 = vpop.permute.xlu0 %316
    %318 = vrot.lane.b32.xlu0 %v315, 17
    %v319 = vpop.permute.xlu0 %318
    %320 = vrot.lane.b32.xlu0 %v312, 17
    %v321 = vpop.permute.xlu0 %320
    %v322 = vsel %vm91, %v317, %v319
    %v323 = vsel %vm91, %v319, %v321
    %v326 = vsel %vm80, %v322, 0.0
    %v327 = vsel %vm81, %v323, 0.0
    %328 = vst [vmem:[#allocation3] sm:$0xf] %v326
    %329 = vst [vmem:[#allocation3 + $0x8] sm:$0xf] %v327
    %330 = vrot.lane.b32.xlu0 %v311, 16
    %v331 = vpop.permute.xlu0 %330
    %332 = vrot.lane.b32.xlu0 %v315, 16
    %v333 = vpop.permute.xlu0 %332
    %334 = vrot.lane.b32.xlu0 %v312, 16
    %v335 = vpop.permute.xlu0 %334
    %v336 = vsel %vm106, %v331, %v333
    %v337 = vsel %vm106, %v333, %v335
    %340 = vst [vmem:[#allocation3 + $0x10] sm:$0xf] %v336
    %341 = vst [vmem:[#allocation3 + $0x18] sm:$0xf] %v337
    %342 = vrot.lane.b32.xlu0 %v311, 15
    %v343 = vpop.permute.xlu0 %342
    %344 = vrot.lane.b32.xlu0 %v315, 15
    %v345 = vpop.permute.xlu0 %344
    %346 = vrot.lane.b32.xlu0 %v312, 15
    %v347 = vpop.permute.xlu0 %346
    %v348 = vsel %vm123, %v343, %v345
    %v349 = vsel %vm123, %v345, %v347
    %v352 = vsel %vm115, %v348, 0.0
    %v353 = vsel %vm116, %v349, 0.0
    %354 = vst [vmem:[#allocation3 + $0x20] sm:$0xf] %v352
    %355 = vst [vmem:[#allocation3 + $0x28] sm:$0xf] %v353
    %356 = vrot.lane.b32.xlu0 %v311, 1
    %v357 = vpop.permute.xlu0 %356
    %358 = vrot.lane.b32.xlu0 %v315, 1
    %v359 = vpop.permute.xlu0 %358
    %360 = vrot.lane.b32.xlu0 %v312, 1
    %v361 = vpop.permute.xlu0 %360
    %v362 = vsel %vm138, %v357, %v359
    %v363 = vsel %vm138, %v359, %v361
    %v366 = vsel %vm80, %v362, 0.0
    %v367 = vsel %vm81, %v363, 0.0
    %368 = vst [vmem:[#allocation3 + $0x30] sm:$0xf] %v366
    %369 = vst [vmem:[#allocation3 + $0x38] sm:$0xf] %v367
    %371 = vst [vmem:[#allocation3 + $0x40] sm:$0xf] %v315
    %372 = vst [vmem:[#allocation3 + $0x48] sm:$0xf] %v312
    %v373 = vcombine.high %v312, %v312
    %374 = vrot.lane.b32.xlu0 %v315, 127
    %v375 = vpop.permute.xlu0 %374
    %376 = vrot.lane.b32.xlu0 %v312, 127
    %v377 = vpop.permute.xlu0 %376
    %378 = vrot.lane.b32.xlu0 %v373, 127
    %v379 = vpop.permute.xlu0 %378
    %v380 = vsel %vm157, %v375, %v377
    %v381 = vsel %vm157, %v377, %v379
    %v384 = vsel %vm115, %v380, 0.0
    %v385 = vsel %vm116, %v381, 0.0
    %386 = vst [vmem:[#allocation3 + $0x50] sm:$0xf] %v384
    %387 = vst [vmem:[#allocation3 + $0x58] sm:$0xf] %v385
    %388 = vrot.lane.b32.xlu0 %v315, 113
    %v389 = vpop.permute.xlu0 %388
    %390 = vrot.lane.b32.xlu0 %v312, 113
    %v391 = vpop.permute.xlu0 %390
    %392 = vrot.lane.b32.xlu0 %v373, 113
    %v393 = vpop.permute.xlu0 %392
    %v394 = vsel %vm172, %v389, %v391
    %v395 = vsel %vm172, %v391, %v393
    %v398 = vsel %vm80, %v394, 0.0
    %v399 = vsel %vm81, %v395, 0.0
    %400 = vst [vmem:[#allocation3 + $0x60] sm:$0xf] %v398
    %401 = vst [vmem:[#allocation3 + $0x68] sm:$0xf] %v399
    %402 = vrot.lane.b32.xlu0 %v315, 112
    %v403 = vpop.permute.xlu0 %402
    %404 = vrot.lane.b32.xlu0 %v312, 112
    %v405 = vpop.permute.xlu0 %404
    %406 = vrot.lane.b32.xlu0 %v373, 112
    %v407 = vpop.permute.xlu0 %406
    %v408 = vsel %vm187, %v403, %v405
    %v409 = vsel %vm187, %v405, %v407
    %412 = vst [vmem:[#allocation3 + $0x70] sm:$0xf] %v408
    %413 = vst [vmem:[#allocation3 + $0x78] sm:$0xf] %v409
    %414 = vrot.lane.b32.xlu0 %v315, 111
    %v415 = vpop.permute.xlu0 %414
    %416 = vrot.lane.b32.xlu0 %v312, 111
    %v417 = vpop.permute.xlu0 %416
    %418 = vrot.lane.b32.xlu0 %v373, 111
    %v419 = vpop.permute.xlu0 %418
    %v420 = vsel %vm200, %v415, %v417
    %v421 = vsel %vm200, %v417, %v419
    %v424 = vsel %vm115, %v420, 0.0
    %v425 = vsel %vm116, %v421, 0.0
    %426 = vst [vmem:[#allocation3 + $0x80] sm:$0xf] %v424
    %427 = vst [vmem:[#allocation3 + $0x88] sm:$0xf] %v425
    %v428 = vld [vmem:[#allocation3] sm:$0xff]
    %v429 = vld [vmem:[#allocation3 + $0x8] sm:$0xff]
    %v430 = vld [vmem:[#allocation3 + $0x10] sm:$0xff]
    %v431 = vld [vmem:[#allocation3 + $0x18] sm:$0xff]
    %v432 = vld [vmem:[#allocation3 + $0x20] sm:$0xff]
    %v433 = vld [vmem:[#allocation3 + $0x28] sm:$0xff]
    %v434 = vld [vmem:[#allocation3 + $0x30] sm:$0xff]
    %v435 = vld [vmem:[#allocation3 + $0x38] sm:$0xff]
    %v436 = vld [vmem:[#allocation3 + $0x40] sm:$0xff]
    %v437 = vld [vmem:[#allocation3 + $0x48] sm:$0xff]
    %v438 = vld [vmem:[#allocation3 + $0x50] sm:$0xff]
    %v439 = vld [vmem:[#allocation3 + $0x58] sm:$0xff]
    %v440 = vld [vmem:[#allocation3 + $0x60] sm:$0xff]
    %v441 = vld [vmem:[#allocation3 + $0x68] sm:$0xff]
    %v442 = vld [vmem:[#allocation3 + $0x70] sm:$0xff]
    %v443 = vld [vmem:[#allocation3 + $0x78] sm:$0xff]
    %v444 = vld [vmem:[#allocation3 + $0x80] sm:$0xff]
    %v445 = vld [vmem:[#allocation3 + $0x88] sm:$0xff]
    %446 = vmatprep.subr.mxu0 %v429
    %447 = vmatpush1.msra.mxu0 %v428
    %448 = vmatprep.subr.mxu0 %v431
    %449 = vmatpush1.msra.mxu0 %v430
    %450 = vmatprep.subr.mxu0 %v433
    %451 = vmatpush1.msra.mxu0 %v432
    %452 = vmatprep.subr.mxu0 %v435
    %453 = vmatpush1.msra.mxu0 %v434
    %454 = vmatprep.subr.mxu0 %v437
    %455 = vmatpush1.msra.mxu0 %v436
    %456 = vmatprep.subr.mxu0 %v439
    %457 = vmatpush1.msra.mxu0 %v438
    %458 = vmatprep.subr.mxu0 %v441
    %459 = vmatpush1.msra.mxu0 %v440
    %460 = vmatprep.subr.mxu0 %v443
    %461 = vmatpush1.msra.mxu0 %v442
    %462 = vmatprep.subr.mxu0 %v445
    %463 = vmatpush1.msra.mxu0 %v444
    %464 = vmatprep.subr.mxu0 0.0
    %465 = vmatpush1.msra.mxu0 0.0
    %466 = vmatprep.subr.mxu0 0.0
    %467 = vmatpush1.msra.mxu0 0.0
    %468 = vmatprep.subr.mxu0 0.0
    %469 = vmatpush1.msra.mxu0 0.0
    %470 = vmatprep.subr.mxu0 0.0
    %471 = vmatpush1.msra.mxu0 0.0
    %472 = vmatprep.subr.mxu0 0.0
    %473 = vmatpush1.msra.mxu0 0.0
    %474 = vmatprep.subr.mxu0 0.0
    %475 = vmatpush1.msra.mxu0 0.0
    %476 = vmatprep.subr.mxu0 0.0
    %477 = vmatpush1.msra.mxu0 0.0
    %478 = vmatprep.subr.mxu0 0.0
    %479 = vmatpush1.msra.mxu0 0.0
    %480 = vmatprep.subr.mxu0 0.0
    %481 = vmatpush1.msra.mxu0 0.0
    %482 = vmatprep.subr.mxu0 0.0
    %483 = vmatpush1.msra.mxu0 0.0
    %484 = vmatprep.subr.mxu0 0.0
    %485 = vmatpush1.msra.mxu0 0.0
    %486 = vmatprep.subr.mxu0 0.0
    %487 = vmatpush1.msra.mxu0 0.0
    %488 = vmatprep.subr.mxu0 0.0
    %489 = vmatpush1.msra.mxu0 0.0
    %490 = vmatprep.subr.mxu0 0.0
    %491 = vmatpush1.msra.mxu0 0.0
    %492 = vmatprep.subr.mxu0 0.0
    %493 = vmatpush1.msra.mxu0 0.0
    %494 = vmatprep.subr.mxu0 0.0
    %495 = vmatpush1.msra.mxu0 0.0
    %496 = vmatprep.subr.mxu0 0.0
    %497 = vmatpush1.msra.mxu0 0.0
    %498 = vmatprep.subr.mxu0 0.0
    %499 = vmatpush1.msra.mxu0 0.0
    %500 = vmatprep.subr.mxu0 0.0
    %501 = vmatpush1.msra.mxu0 0.0
    %502 = vmatprep.subr.mxu0 0.0
    %503 = vmatpush1.msra.mxu0 0.0
    %504 = vmatprep.subr.mxu0 0.0
    %505 = vmatpush1.msra.mxu0 0.0
    %506 = vmatprep.subr.mxu0 0.0
    %507 = vmatpush1.msra.mxu0 0.0
    %508 = vmatprep.subr.mxu0 0.0
    %509 = vmatpush1.msra.mxu0 0.0
    %510 = vmatprep.mubr.f32.mxu0 0.0
    %511 = vmatmul.mubr.f32.gmra.mrb[0].mxu0 %v229
    %v512 = vpop.f32.mrb[0].mxu0
    %v513 = vadd.f32 0.0, %v512
    %v514 = vpop.f32.mrb[0].mxu0
    %v515 = vadd.f32 0.0, %v514
    %516 = vdwg.mxu0
    %s517 = scalar_lea.vmem [#allocation5], 16
    %518 = vst [vmem:[%s517] sm:$0xff] %v513
    %519 = vst [vmem:[%s517 + $0x8] sm:$0xff] %v515
    %v520 = vadd.f32 %v513, %v515
    %521 = vadd.xlane.f32.xlu0 %v520
    %v522 = vpop.xlane.xlu0 %521
    %v523 = vadd.f32 %v307, %v522
    %v524 = vmul.f32 %v523, 0.001953125
    %v525 = vld [vmem:[#allocation5] sm:$0xff]
    %v526 = vld [vmem:[#allocation5 + $0x8] sm:$0xff]
    %v527 = vsub.f32 %v525, %v524
    %v528 = vsub.f32 %v526, %v524
    %v529 = vmul.f32 %v527, %v527
    %v530 = vmul.f32 %v528, %v528
    %v531 = vadd.f32 %v529, %v530
    %532 = vadd.xlane.f32.xlu0 %v531
    %v533 = vpop.xlane.xlu0 %532
    %v534 = vadd.f32 %v533, 0.0
    %v535 = vld [vmem:[%s517] sm:$0xff]
    %v536 = vld [vmem:[%s517 + $0x8] sm:$0xff]
    %v537 = vsub.f32 %v535, %v524
    %v538 = vsub.f32 %v536, %v524
    %v539 = vmul.f32 %v537, %v537
    %v540 = vmul.f32 %v538, %v538
    %v541 = vadd.f32 %v539, %v540
    %542 = vadd.xlane.f32.xlu0 %v541
    %v543 = vpop.xlane.xlu0 %542
    %v544 = vadd.f32 %v534, %v543
    %v545 = vmul.f32 %v544, 0.001953125
    %v546 = vld [vmem:[%s2] sm:$0xff]
    %v547 = vadd.f32 %v545, 1e-05
    %v548 = vrsqrt.pop %v547
    %v549 = vmul.f32 %v546, %v548
    %v550 = vld [vmem:[%s3] sm:$0xff]
    %v551 = vmul.f32 %v524, %v549
    %v552 = vsub.f32 %v550, %v551
    %s553 = sld [smem:[#allocation4]]
    %555 = vset.pattern.permute.xlu0 0
    %556 = vperm.xlu0 %555, %v549
    %v557 = vpop.permute.xlu0 %556
    %v559 = vmul.f32 %v525, %v557
    %v560 = vmul.f32 %v526, %v557
    %562 = vset.pattern.permute.xlu0 0
    %563 = vperm.xlu0 %562, %v552
    %v564 = vpop.permute.xlu0 %563
    %v566 = vadd.f32 %v559, %v564
    %v567 = vadd.f32 %v560, %v564
    %vm568 = vcmp.ge.f32.partialorder %v566, 0.0
    %vm569 = vcmp.ge.f32.partialorder %v567, 0.0
    %v570 = vstv %s553
    %v571 = vmul.f32 %v570, %v566
    %v572 = vmul.f32 %v570, %v567
    %v573 = vsel %vm568, %v566, %v571
    %v574 = vsel %vm569, %v567, %v572
    %575 = vst [vmem:[#allocation5] sm:$0xff] %v573
    %576 = vst [vmem:[#allocation5 + $0x8] sm:$0xff] %v574
    %v577 = vld [vmem:[%s517] sm:$0xff]
    %v578 = vld [vmem:[%s517 + $0x8] sm:$0xff]
    %v579 = vmul.f32 %v577, %v557
    %v580 = vmul.f32 %v578, %v557
    %v581 = vadd.f32 %v579, %v564
    %v582 = vadd.f32 %v580, %v564
    %vm583 = vcmp.ge.f32.partialorder %v581, 0.0
    %vm584 = vcmp.ge.f32.partialorder %v582, 0.0
    %v585 = vmul.f32 %v570, %v581
    %v586 = vmul.f32 %v570, %v582
    %v587 = vsel %vm583, %v581, %v585
    %v588 = vsel %vm584, %v582, %v586
    %589 = vst [vmem:[%s517] sm:$0xff] %v587
    %590 = vst [vmem:[%s517 + $0x8] sm:$0xff] %v588
    // Predicated region
    $region22: #{tpu_custom_call.1} parent=1 // pred_check
      _
    $region23: #{tpu_custom_call.1} parent=1 // pred_check_branch
      %592 = sbr.rel (0) target = $region25
    $region24: #{tpu_custom_call.1} parent=1 // pred_region
      %s594 = ssub.s32 512, 512
      %595 = vsyncadd [#allocation6], %s594
      %s596 = sshll.u32 [#allocation5], 4
      %s597 = int_to_ptr.vmem [resolvable:$true] %s596
      %602 = dma.vmem_to_hbm [thread:$0]  %s597, 512, %s5, [#allocation6], 256, 256, 16
    $region25: #{tpu_custom_call.1} parent=1 // pred_fallthru
      _
    // Predicated region
    $region26: #{tpu_custom_call.1} parent=1 // pred_check
      _
    $region27: #{tpu_custom_call.1} parent=1 // pred_check_branch
      %604 = sbr.rel (0) target = $region29
    $region28: #{tpu_custom_call.1} parent=1 // pred_region
      %605 = dma.done [#allocation6], 512
    $region29: #{tpu_custom_call.1} parent=1 // pred_fallthru
      _
    %606 = vsyncpa [#allocation6], 1

</llo_original>
